<compile_context>
chip_gen: v7x
topology: tpu7x:2x2x1
jax: 0.10.0
libtpu: 0.0.40
codegen_flags: <defaults>
</compile_context>

<pallas_src>
import functools
from math import sqrt

import jax
import jax.numpy as jnp
from jax import lax
from jax.experimental import pallas as pl
from jax.experimental.pallas import tpu as pltpu


# ----------------------------------------------------------------------------
# Pallas fused conv-GEMM kernel:  y = act( A @ W + shift )
# ----------------------------------------------------------------------------
def _make_conv_gemm_kernel(leaky: bool):
    def kernel(a_ref, w_ref, b_ref, o_ref):
        acc = jnp.dot(a_ref[...], w_ref[...], preferred_element_type=jnp.float32)
        y = acc + b_ref[...]
        if leaky:
            y = jnp.where(y > 0, y, 0.1 * y)
        o_ref[...] = y.astype(o_ref.dtype)
    return kernel


def _round_up(a, m):
    return ((a + m - 1) // m) * m


def _choose_tm(mp):
    # Largest M tile that still leaves >=2 grid steps (keeps both v7x TensorCores
    # busy via dimension_semantics=("parallel",)) while amortizing per-step overhead.
    for cand in (512, 256, 128):
        if mp % cand == 0 and mp // cand >= 2:
            return cand
    return 128


def conv_gemm_pallas(patches, w_t, shift, leaky):
    """patches: (M, Kd) bf16, w_t: (Kd, F) bf16 (BN scale pre-folded), shift: (F,) f32.

    Returns (M, F) f32 = leaky(patches @ w_t + shift).
    """
    M, Kd = patches.shape
    assert w_t.shape[0] == Kd, (patches.shape, w_t.shape)
    F = w_t.shape[1]

    Mp = _round_up(M, 128)
    Fp = _round_up(F, 128)          # keep output stores lane-dense / unmasked
    TM = _choose_tm(Mp)

    a = patches if Mp == M else jnp.pad(patches, ((0, Mp - M), (0, 0)))
    w = jnp.pad(w_t, ((0, 0), (0, Fp - F)))
    b = jnp.pad(shift.astype(jnp.float32).reshape(1, F), ((0, 0), (0, Fp - F)))

    cost = pl.CostEstimate(
        flops=2 * Mp * Kd * Fp,
        transcendentals=0,
        bytes_accessed=Mp * Kd * 2 + Kd * Fp * 2 + Fp * 4 + Mp * Fp * 4,
    )

    out = pl.pallas_call(
        _make_conv_gemm_kernel(leaky),
        out_shape=jax.ShapeDtypeStruct((Mp, Fp), jnp.float32),
        grid=(Mp // TM,),
        in_specs=[
            # K is left unpadded in HBM; block dim == full array dim is legal,
            # Mosaic pads in VMEM.
            pl.BlockSpec((TM, Kd), lambda i: (i, 0)),
            pl.BlockSpec((Kd, Fp), lambda i: (0, 0)),   # weights resident across grid
            pl.BlockSpec((1, Fp), lambda i: (0, 0)),    # folded BN/bias shift
        ],
        out_specs=pl.BlockSpec((TM, Fp), lambda i: (i, 0)),
        compiler_params=pltpu.CompilerParams(dimension_semantics=("parallel",)),
        cost_estimate=cost,
    )(a, w, b)
    return out[:M, :F]


# ----------------------------------------------------------------------------
# JAX glue ops (all NHWC)
# ----------------------------------------------------------------------------
def conv_block(x, params, mdef):
    """x: (N, H, W, C) -> (N, OH, OW, F)."""
    K = int(mdef['size'])
    stride = int(mdef['stride'])
    pad = (K - 1) // 2 if int(mdef['pad']) else 0
    bn = int(mdef['batch_normalize'])
    leaky = mdef['activation'] == 'leaky'

    N, H, W, C = x.shape
    w = params['weight']                              # (F, C, K, K), PyTorch layout
    F = w.shape[0]

    if bn:
        eps = 1e-5
        scale = params['gamma'] / jnp.sqrt(params['running_var'] + eps)
        shift = params['beta'] - params['running_mean'] * scale
    else:
        scale = jnp.ones((F,), jnp.float32)
        shift = params['bias']

    # Fold BN scale into the weights at trace time; GEMM inputs in bf16.
    w_t = (w.reshape(F, -1).T * scale[None, :]).astype(jnp.bfloat16)   # (C*K*K, F)

    xb = x.astype(jnp.bfloat16)
    if K == 1 and stride == 1 and pad == 0:
        patches = xb.reshape(N * H * W, C)
        OH, OW = H, W
    else:
        # Feature dim ordering is (c, kh, kw) with c slowest -> matches the
        # PyTorch (F, C, KH, KW).reshape(F, -1) weight flatten above.
        p = lax.conv_general_dilated_patches(
            xb, (K, K), (stride, stride), ((pad, pad), (pad, pad)),
            dimension_numbers=('NHWC', 'HWIO', 'NHWC'))
        OH, OW = p.shape[1], p.shape[2]
        patches = p.reshape(N * OH * OW, C * K * K)

    y = conv_gemm_pallas(patches, w_t, shift, leaky)   # (M, F) f32
    return y.reshape(N, OH, OW, F)


def maxpool_block(x, mdef):
    size = int(mdef['size'])
    stride = int(mdef['stride'])
    pad = (size - 1) // 2
    if size == 2 and stride == 1:
        x = jnp.pad(x, ((0, 0), (0, 1), (0, 1), (0, 0)))   # darknet ZeroPad2d((0,1,0,1))
    return lax.reduce_window(
        x, -jnp.inf, lax.max,
        window_dimensions=(1, size, size, 1),
        window_strides=(1, stride, stride, 1),
        padding=((0, 0), (pad, pad), (pad, pad), (0, 0)))


def upsample_block(x, mdef):
    sf = int(mdef['stride'])
    return jnp.repeat(jnp.repeat(x, sf, axis=1), sf, axis=2)   # nearest, NHWC


def yolo_block(x, anchors, num_classes, input_size):
    """x: (N, gh, gw, na * (5 + num_classes)) NHWC -> (N, na*gh*gw, 5 + num_classes)."""
    na = len(anchors)
    nb, gh, gw, _ = x.shape
    bbox_attrs = 5 + num_classes
    stride = input_size[0] / gh

    # channel = a * bbox_attrs + attr  (same ordering as the PyTorch NCHW view)
    pred = x.astype(jnp.float32).reshape(nb, gh, gw, na, bbox_attrs)
    pred = pred.transpose(0, 3, 1, 2, 4)               # (nb, na, gh, gw, attrs)

    cx = jax.nn.sigmoid(pred[..., 0])
    cy = jax.nn.sigmoid(pred[..., 1])
    bw = pred[..., 2]
    bh = pred[..., 3]
    conf_obj = jax.nn.sigmoid(pred[..., 4])
    conf_cls = jax.nn.sigmoid(pred[..., 5:])

    grid_x = jnp.tile(jnp.arange(gw, dtype=jnp.float32), (gh, 1)).reshape(1, 1, gh, gw)
    grid_y = jnp.tile(jnp.arange(gh, dtype=jnp.float32), (gw, 1)).T.reshape(1, 1, gh, gw)
    scaled = jnp.array([(aw / stride, ah / stride) for aw, ah in anchors], jnp.float32)
    anchor_w = scaled[:, 0].reshape(1, na, 1, 1)
    anchor_h = scaled[:, 1].reshape(1, na, 1, 1)

    px = cx + grid_x
    py = cy + grid_y
    pw = jnp.exp(bw) * anchor_w
    ph = jnp.exp(bh) * anchor_h
    pred_boxes = jnp.stack([px, py, pw, ph], axis=-1)

    return jnp.concatenate(
        [pred_boxes.reshape(nb, -1, 4) * stride,
         conf_obj.reshape(nb, -1, 1),
         conf_cls.reshape(nb, -1, num_classes)], axis=-1)


# ----------------------------------------------------------------------------
# In-script "config file" (replaces parse_model_config; no file I/O).
# Route indices use only negative or >0 layer indices (as real YOLO cfgs do), so the
# PyTorch create_modules filter bookkeeping and the forward pass agree.
# ----------------------------------------------------------------------------
ANCHORS = '10,13, 16,30, 33,23, 30,61, 62,45, 59,119, 116,90, 156,198, 373,326'
MODULE_DEFS = [
    {'type': 'net', 'channels': '3', 'height': '32', 'width': '32'},
    {'type': 'convolutional', 'batch_normalize': 1, 'filters': 8, 'size': 3, 'stride': 1, 'pad': 1, 'activation': 'leaky'},
    {'type': 'convolutional', 'batch_normalize': 1, 'filters': 8, 'size': 3, 'stride': 1, 'pad': 1, 'activation': 'leaky'},
    {'type': 'maxpool', 'size': 2, 'stride': 2},
    {'type': 'convolutional', 'batch_normalize': 1, 'filters': 16, 'size': 3, 'stride': 1, 'pad': 1, 'activation': 'leaky'},
    {'type': 'convolutional', 'batch_normalize': 1, 'filters': 16, 'size': 1, 'stride': 1, 'pad': 1, 'activation': 'leaky'},
    {'type': 'shortcut', 'from': '-2', 'activation': 'linear'},
    {'type': 'convolutional', 'batch_normalize': 0, 'filters': 27, 'size': 1, 'stride': 1, 'pad': 1, 'activation': 'linear'},
    {'type': 'yolo', 'mask': '6,7,8', 'anchors': ANCHORS, 'classes': 4},
    {'type': 'route', 'layers': '-3'},
    {'type': 'upsample', 'stride': 2},
    {'type': 'route', 'layers': '-1,1'},
    {'type': 'convolutional', 'batch_normalize': 1, 'filters': 16, 'size': 3, 'stride': 1, 'pad': 1, 'activation': 'leaky'},
    {'type': 'convolutional', 'batch_normalize': 0, 'filters': 27, 'size': 1, 'stride': 1, 'pad': 1, 'activation': 'linear'},
    {'type': 'yolo', 'mask': '0,1,2', 'anchors': ANCHORS, 'classes': 4},
]
# TODO(synk): parse_model_config/load_weights read files from disk; replaced here by an
# in-script config list and deterministic random initialization.


def init_params(module_defs, key):
    hyper = module_defs[0]
    out_filters = [int(hyper['channels'])]
    params = []
    for mdef in module_defs[1:]:
        p = {}
        if mdef['type'] == 'convolutional':
            cin = out_filters[-1]
            f = int(mdef['filters'])
            k = int(mdef['size'])
            key, kw_, kb_, kg_, kbe_, km_, kv_ = jax.random.split(key, 7)
            fan_in = cin * k * k
            p['weight'] = jax.random.normal(kw_, (f, cin, k, k), jnp.float32) / sqrt(fan_in)
            if int(mdef['batch_normalize']):
                p['gamma'] = 1.0 + 0.1 * jax.random.normal(kg_, (f,), jnp.float32)
                p['beta'] = 0.1 * jax.random.normal(kbe_, (f,), jnp.float32)
                p['running_mean'] = 0.1 * jax.random.normal(km_, (f,), jnp.float32)
                p['running_var'] = 1.0 + 0.1 * jax.random.uniform(kv_, (f,), jnp.float32)
            else:
                p['bias'] = 0.1 * jax.random.normal(kb_, (f,), jnp.float32)
            out_filters.append(f)
        elif mdef['type'] == 'route':
            layers = [int(v) for v in str(mdef['layers']).split(',')]
            out_filters.append(sum(out_filters[i + 1 if i > 0 else i] for i in layers))
        elif mdef['type'] == 'shortcut':
            out_filters.append(out_filters[int(mdef['from'])])
        else:
            out_filters.append(out_filters[-1])
        params.append(p)
    return params


def darknet_forward(x_nchw, params, module_defs):
    hyper = module_defs[0]
    input_size = (int(hyper['height']), int(hyper['width']))
    x = jnp.transpose(x_nchw, (0, 2, 3, 1))            # NCHW -> NHWC once
    output = []
    layer_outputs = []
    for mdef, p in zip(module_defs[1:], params):
        t = mdef['type']
        if t == 'convolutional':
            x = conv_block(x, p, mdef)
        elif t == 'maxpool':
            x = maxpool_block(x, mdef)
        elif t == 'upsample':
            x = upsample_block(x, mdef)
        elif t == 'route':
            layer_i = [int(v) for v in str(mdef['layers']).split(',')]
            x = jnp.concatenate([layer_outputs[i] for i in layer_i], axis=-1)
        elif t == 'shortcut':
            layer_i = int(mdef['from'])
            x = layer_outputs[-1] + layer_outputs[layer_i]
        elif t == 'yolo':
            mask = [int(v) for v in mdef['mask'].split(',')]
            flat = [int(v) for v in mdef['anchors'].split(',')]
            anchors = [(flat[i], flat[i + 1]) for i in range(0, len(flat), 2)]
            anchors = [anchors[i] for i in mask]
            x = yolo_block(x, anchors, int(mdef['classes']), input_size)
            output.append(x)
        layer_outputs.append(x)
    return jnp.concatenate(output, axis=1)


# ----------------------------------------------------------------------------
# Reference conv (pure JAX, f32) used only for a loose numerical self-check.
# ----------------------------------------------------------------------------
def _conv_ref_nhwc(x, p, mdef):
    K = int(mdef['size'])
    stride = int(mdef['stride'])
    pad = (K - 1) // 2 if int(mdef['pad']) else 0
    w = jnp.transpose(p['weight'], (2, 3, 1, 0))       # (F,C,K,K) -> HWIO
    y = lax.conv_general_dilated(
        x, w, (stride, stride), ((pad, pad), (pad, pad)),
        dimension_numbers=('NHWC', 'HWIO', 'NHWC'))
    if int(mdef['batch_normalize']):
        eps = 1e-5
        scale = p['gamma'] / jnp.sqrt(p['running_var'] + eps)
        y = y * scale + (p['beta'] - p['running_mean'] * scale)
    else:
        y = y + p['bias']
    if mdef['activation'] == 'leaky':
        y = jnp.where(y > 0, y, 0.1 * y)
    return y


if __name__ == "__main__":
    key = jax.random.PRNGKey(0)
    key, xkey = jax.random.split(key)
    x = jax.random.normal(xkey, (2, 3, 32, 32), jnp.float32)   # NCHW, like PyTorch

    params = init_params(MODULE_DEFS, key)

    # Loose self-check of the fused Pallas conv (bf16 GEMM, f32 accumulate) against
    # the f32 XLA conv on the first layer.
    x_nhwc = jnp.transpose(x, (0, 2, 3, 1))
    y_k = conv_block(x_nhwc, params[0], MODULE_DEFS[1])
    y_r = _conv_ref_nhwc(x_nhwc, params[0], MODULE_DEFS[1])
    assert y_k.shape == y_r.shape, (y_k.shape, y_r.shape)
    assert bool(jnp.allclose(y_k, y_r, rtol=1e-1, atol=1e-1)), \
        float(jnp.max(jnp.abs(y_k - y_r)))

    fwd = jax.jit(functools.partial(darknet_forward, module_defs=MODULE_DEFS))
    out = fwd(x, params)
    out = jax.block_until_ready(out)

    # 2 yolo heads: 3*16*16 + 3*32*32 = 3840 predictions, 5 + 4 class attrs each.
    assert out.shape == (2, 3840, 9), out.shape
    assert bool(jnp.all(jnp.isfinite(out)))
    print("KERNEL_OK")
</pallas_src>

<mosaic_0001>
module attributes {stable_mosaic.version = 11 : i64} {
  func.func @kernel(%arg0: i32, %arg1: memref<512x27xbf16, #tpu.memory_space<vmem>>, %arg2: memref<27x128xbf16, #tpu.memory_space<vmem>>, %arg3: memref<1x128xf32, #tpu.memory_space<vmem>>, %arg4: memref<512x128xf32, #tpu.memory_space<vmem>>) attributes {dimension_semantics = [#tpu.dimension_semantics<parallel>], iteration_bounds = array<i64: 4>, scalar_prefetch = 0 : i64, scratch_operands = 0 : i64, tpu.core_type = #tpu.core_type<tc>, window_params = [{transform_indices = @transform_0, window_bounds = array<i64: 512, 27>}, {pipeline_mode = #tpu.pipeline_mode<synchronous>, transform_indices = @transform_1, window_bounds = array<i64: 27, 128>}, {pipeline_mode = #tpu.pipeline_mode<synchronous>, transform_indices = @transform_2, window_bounds = array<i64: 1, 128>}, {transform_indices = @transform_3, window_bounds = array<i64: 512, 128>}]} {
    %c0 = arith.constant 0 : index
    %c0_0 = arith.constant 0 : index
    %0 = vector.load %arg1[%c0, %c0_0] : memref<512x27xbf16, #tpu.memory_space<vmem>>, vector<512x27xbf16>
    %c0_1 = arith.constant 0 : index
    %c0_2 = arith.constant 0 : index
    %1 = vector.load %arg2[%c0_1, %c0_2] : memref<27x128xbf16, #tpu.memory_space<vmem>>, vector<27x128xbf16>
    %cst = arith.constant dense<0.000000e+00> : vector<512x128xf32>
    %2 = tpu.matmul %0, %1, %cst {dimension_numbers = #tpu.dot_dimension_numbers<[1], [0], [0], [1], [0, 0, 1, 1], [], []>} : vector<512x27xbf16>, vector<27x128xbf16>, vector<512x128xf32> -> vector<512x128xf32>
    %c0_3 = arith.constant 0 : index
    %c0_4 = arith.constant 0 : index
    %3 = vector.load %arg3[%c0_3, %c0_4] : memref<1x128xf32, #tpu.memory_space<vmem>>, vector<1x128xf32>
    %4 = vector.broadcast %3 : vector<1x128xf32> to vector<512x128xf32>
    %5 = arith.addf %2, %4 : vector<512x128xf32>
    %cst_5 = arith.constant 0.000000e+00 : f32
    %6 = vector.broadcast %cst_5 : f32 to vector<512x128xf32>
    %7 = arith.cmpf ogt, %5, %6 : vector<512x128xf32>
    %cst_6 = arith.constant 1.000000e-01 : f32
    %8 = vector.broadcast %cst_6 : f32 to vector<512x128xf32>
    %9 = arith.mulf %8, %5 : vector<512x128xf32>
    %10 = arith.select %7, %5, %9 : vector<512x128xi1>, vector<512x128xf32>
    %c0_7 = arith.constant 0 : index
    %c0_8 = arith.constant 0 : index
    %11 = vector.load %arg4[%c0_7, %c0_8] : memref<512x128xf32, #tpu.memory_space<vmem>>, vector<512x128xf32>
    tpu.vector_store %arg4[%c0_7, %c0_8], %10 {strides = array<i32>} : memref<512x128xf32, #tpu.memory_space<vmem>>, vector<512x128xf32>,
    return
  }
  func.func @transform_0(%arg0: i32) -> (i32, i32) {
    %c0_i32 = arith.constant 0 : i32
    %c0_i32_0 = arith.constant 0 : i32
    return %arg0, %c0_i32 : i32, i32
  }
  func.func @transform_1(%arg0: i32) -> (i32, i32) {
    %c0_i32 = arith.constant 0 : i32
    %c0_i32_0 = arith.constant 0 : i32
    %c0_i32_1 = arith.constant 0 : i32
    return %c0_i32, %c0_i32_0 : i32, i32
  }
  func.func @transform_2(%arg0: i32) -> (i32, i32) {
    %c0_i32 = arith.constant 0 : i32
    %c0_i32_0 = arith.constant 0 : i32
    %c0_i32_1 = arith.constant 0 : i32
    return %c0_i32, %c0_i32_0 : i32, i32
  }
  func.func @transform_3(%arg0: i32) -> (i32, i32) {
    %c0_i32 = arith.constant 0 : i32
    %c0_i32_0 = arith.constant 0 : i32
    return %arg0, %c0_i32 : i32, i32
  }
}

</mosaic_0001>

<llo_original>
// kernel: tpu_custom_call.1
$region0: #{tpu_custom_call.1}
  #allocation0 [shape = 'u32[]', space=smem, size = 0x4, offset = 0x4, fixed_abs, tag = 'smem constant byte address 0x4 - core index']
  #allocation1 [shape = 'u32[144,128]{1,0:T(1,128)}', space=vmem, size = 0x12000, scoped, tag = 'internal scratch']
  %s0 = inlined_call_operand.vmem [shape: bf16[2048,27], index: 0, kind: input, shape index: {}]
  %s1 = inlined_call_operand.vmem [shape: bf16[27,128], index: 1, kind: input, shape index: {}]
  %s2 = inlined_call_operand.vmem [shape: f32[1,128], index: 2, kind: input, shape index: {}]
  %s3 = inlined_call_operand.hbm [shape: f32[2048,128], index: 3, kind: output, shape index: {}]
  %s4 = sld [smem:[#allocation0]]
  $region45: #{tpu_custom_call.1} parent=0
    _
  %s6 = ssub.s32 1, %s4
  %s7 = scalar_select 0, %s6, %s4
  $region1: #{tpu_custom_call.1} parent=0
    #allocation2 [shape = 'u8[524288]{0}', space=vmem, size = 0x80000, scoped, tag = 'output window, operand 0']
    #allocation3 [shape = 's32[2]{0}', space=sflag, size = 0x8, scoped, tag = 'scoped memory for tpu_custom_call.1']
    %8 = vsyncpa [#allocation3], 0
    %s9 = scalar_lea.sflag [#allocation3], 1
    %10 = vsyncpa %s9, 0
    loop: start=0, step=1, limit=6
    $region2: #{tpu_custom_call.1} parent=1 // loop_pre_header
      _
    $region3: #{tpu_custom_call.1} parent=1 // loop_header
      %s12 = sphi 0, %s16
      %p13 = scmp.ge.s32.totalorder %s12, 6
      %s22 = sphi 0, %s24
      %s25 = sphi 0, %s22
      %s26 = sphi 0, %s25
      %s42 = sphi 0, %s26
      %s46 = sphi 0, %s46
      %s48 = sphi 0, %s46
      %s49 = sphi 0, %s48
      %s63 = sphi 0, %s49
      %s67 = sphi 0, %s67
      %s69 = sphi 0, %s67
      %s70 = sphi 0, %s69
      %s84 = sphi 0, %s70
      %s90 = sphi 0, %s92
      %s93 = sphi 0, %s90
      %s94 = sphi 0, %s93
      %s110 = sphi 0, %s94
    $region4: #{tpu_custom_call.1} parent=1 // loop_header_branch
      %15 = sbr.rel (%p13) target = $region8
    $region5: #{tpu_custom_call.1} parent=1 // loop_body
      %s17 = ssub.s32 %s12, 1
      %s18 = ssub.s32 %s12, 2
      %s19 = sadd.s32 %s12, 1
      %s20 = ssub.s32 %s12, %s19
      %p21 = scmp.eq.s32.totalorder %s20, 0
      %s23 = sadd.s32 %s22, 1
      %s24 = scalar_select %p21, %s22, %s23
      %p27 = pneg %p21
      %p28 = scmp.eq.s32.totalorder %s12, 3
      %p29 = por %p27, %p28
      %p30 = scmp.ne.s32.totalorder %s22, %s25
      %p31 = scmp.eq.s32.totalorder %s12, 0
      %p32 = por %p30, %p31
      %p33 = scmp.ne.s32.totalorder %s22, %s25
      %p34 = scmp.eq.s32.totalorder %s17, 3
      %p35 = por %p33, %p34
      %p36 = scmp.ne.s32.totalorder %s25, %s26
      %p37 = scmp.eq.s32.totalorder %s17, 0
      %p38 = por %p36, %p37
      %p39 = scmp.ne.s32.totalorder %s25, %s26
      %p40 = scmp.eq.s32.totalorder %s18, 3
      %p41 = por %p39, %p40
      %p43 = scmp.ne.s32.totalorder %s26, %s42
      %p44 = scmp.eq.s32.totalorder %s18, 0
      %p45 = por %p43, %p44
      %s47 = sadd.s32 %s46, 1
      %p50 = scmp.eq.s32.totalorder %s12, 3
      %p51 = scmp.ne.s32.totalorder %s46, %s48
      %p52 = scmp.eq.s32.totalorder %s12, 0
      %p53 = por %p51, %p52
      %p54 = scmp.ne.s32.totalorder %s46, %s48
      %p55 = scmp.eq.s32.totalorder %s17, 3
      %p56 = por %p54, %p55
      %p57 = scmp.ne.s32.totalorder %s48, %s49
      %p58 = scmp.eq.s32.totalorder %s17, 0
      %p59 = por %p57, %p58
      %p60 = scmp.ne.s32.totalorder %s48, %s49
      %p61 = scmp.eq.s32.totalorder %s18, 3
      %p62 = por %p60, %p61
      %p64 = scmp.ne.s32.totalorder %s49, %s63
      %p65 = scmp.eq.s32.totalorder %s18, 0
      %p66 = por %p64, %p65
      %s68 = sadd.s32 %s67, 1
      %p71 = scmp.eq.s32.totalorder %s12, 3
      %p72 = scmp.ne.s32.totalorder %s67, %s69
      %p73 = scmp.eq.s32.totalorder %s12, 0
      %p74 = por %p72, %p73
      %p75 = scmp.ne.s32.totalorder %s67, %s69
      %p76 = scmp.eq.s32.totalorder %s17, 3
      %p77 = por %p75, %p76
      %p78 = scmp.ne.s32.totalorder %s69, %s70
      %p79 = scmp.eq.s32.totalorder %s17, 0
      %p80 = por %p78, %p79
      %p81 = scmp.ne.s32.totalorder %s69, %s70
      %p82 = scmp.eq.s32.totalorder %s18, 3
      %p83 = por %p81, %p82
      %p85 = scmp.ne.s32.totalorder %s70, %s84
      %p86 = scmp.eq.s32.totalorder %s18, 0
      %p87 = por %p85, %p86
      %s88 = ssub.s32 %s12, %s19
      %p89 = scmp.eq.s32.totalorder %s88, 0
      %s91 = sadd.s32 %s90, 1
      %s92 = scalar_select %p89, %s90, %s91
      %p95 = pneg %p89
      %p96 = scmp.eq.s32.totalorder %s12, 3
      %p97 = por %p95, %p96
      %p98 = scmp.ne.s32.totalorder %s90, %s93
      %p99 = scmp.eq.s32.totalorder %s12, 0
      %p100 = por %p98, %p99
      %p101 = scmp.ne.s32.totalorder %s90, %s93
      %p102 = scmp.eq.s32.totalorder %s17, 3
      %p103 = por %p101, %p102
      %p104 = scmp.ne.s32.totalorder %s93, %s94
      %p105 = scmp.eq.s32.totalorder %s17, 0
      %p106 = por %p104, %p105
      %p107 = scmp.ne.s32.totalorder %s93, %s94
      %p108 = scmp.eq.s32.totalorder %s18, 3
      %p109 = por %p107, %p108
      %p111 = scmp.ne.s32.totalorder %s94, %s110
      %p112 = scmp.eq.s32.totalorder %s18, 0
      %p113 = por %p111, %p112
      %p114 = scmp.le.s32.totalorder 1, %s12
      %p115 = scmp.lt.s32.totalorder %s12, 5
      %p116 = pnand %p114, %p115
      %p117 = pneg %p116
      // Predicated region
      $region9: #{tpu_custom_call.1} parent=5 // pred_check
        _
      $region10: #{tpu_custom_call.1} parent=5 // pred_check_branch
        %119 = sbr.rel (%p116) target = $region12
      $region11: #{tpu_custom_call.1} parent=5 // pred_region
        %s120 = ssub.s32 %s12, 1
        // Predicated region
        $region13: #{tpu_custom_call.1} parent=11 // pred_check
          %p121 = pneg %p59
        $region14: #{tpu_custom_call.1} parent=11 // pred_check_branch
          %123 = sbr.rel (%p121) target = $region16
        $region15: #{tpu_custom_call.1} parent=11 // pred_region
          _
        $region16: #{tpu_custom_call.1} parent=11 // pred_fallthru
          _
        // Predicated region
        $region17: #{tpu_custom_call.1} parent=11 // pred_check
          %p124 = pneg %p80
        $region18: #{tpu_custom_call.1} parent=11 // pred_check_branch
          %126 = sbr.rel (%p124) target = $region20
        $region19: #{tpu_custom_call.1} parent=11 // pred_region
          _
        $region20: #{tpu_custom_call.1} parent=11 // pred_fallthru
          _
      $region12: #{tpu_custom_call.1} parent=5 // pred_fallthru
        _
      %p127 = scmp.lt.s32.totalorder %s12, 4
      // Predicated region
      $region21: #{tpu_custom_call.1} parent=5 // pred_check
        %p128 = pneg %p127
      $region22: #{tpu_custom_call.1} parent=5 // pred_check_branch
        %130 = sbr.rel (%p128) target = $region24
      $region23: #{tpu_custom_call.1} parent=5 // pred_region
        // Predicated region
        $region25: #{tpu_custom_call.1} parent=23 // pred_check
          %p131 = pneg %p32
        $region26: #{tpu_custom_call.1} parent=23 // pred_check_branch
          %133 = sbr.rel (%p131) target = $region28
        $region27: #{tpu_custom_call.1} parent=23 // pred_region
          %s134 = smul.u32 64, %s12
          %p135 = scmp.lt.s32.totalorder %s134, 255
          %s136 = scalar_select %p135, %s134, 255
          %s137 = smul.addr %s136, 4
          %s138 = scalar_lea.vmem %s0, %s137
          %s139 = smul.u32 64, %s12
        $region28: #{tpu_custom_call.1} parent=23 // pred_fallthru
          _
      $region24: #{tpu_custom_call.1} parent=5 // pred_fallthru
        _
      %p140 = scmp.le.s32.totalorder 1, %s12
      %p141 = scmp.lt.s32.totalorder %s12, 5
      %p142 = pnand %p140, %p141
      %p143 = pneg %p142
      // Predicated region
      $region29: #{tpu_custom_call.1} parent=5 // pred_check
        _
      $region30: #{tpu_custom_call.1} parent=5 // pred_check_branch
        %145 = sbr.rel (%p142) target = $region32
      $region31: #{tpu_custom_call.1} parent=5 // pred_region
        %s146 = ssub.s32 %s12, 1
        %s147 = smul.u32 64, %s17
        %p148 = scmp.lt.s32.totalorder %s147, 255
        %s149 = scalar_select %p148, %s147, 255
        %s150 = smul.addr %s149, 4
        %s151 = scalar_lea.vmem %s0, %s150
        %p152 = pneg %p38
        %p153 = pneg %p35
        %p154 = pneg %p59
        %p155 = pneg %p56
        %p156 = pneg %p80
        %p157 = pneg %p77
        %p158 = pneg %p106
        %p159 = pneg %p103
        %s160 = sand.u32 %s93, 1
        %s161 = scalar_lea.sflag [#allocation3], %s160
        %s162 = sand.u32 %s93, 1
        %s163 = smul.addr %s162, 512
        %s164 = scalar_lea.vmem [#allocation2], %s163
        %s165 = smul.u32 64, %s17
        %p166 = scmp.lt.s32.totalorder %s165, 255
        %s167 = scalar_select %p166, %s165, 255
        %s168 = smul.addr %s167, 4
        %s169 = scalar_lea.vmem %s0, %s168
        %s170 = smul.u32 64, %s17
        %s171 = smul.u32 64, %s17
        %v173 = vld [vmem:[%s169] sm:$0xf]
        %v174 = vld [vmem:[%s169 + $0x4] sm:$0xf]
        %v175 = vld [vmem:[%s169 + $0x8] sm:$0xf]
        %v176 = vld [vmem:[%s169 + $0xc] sm:$0xf]
        %v177 = vld [vmem:[%s169 + $0x10] sm:$0xf]
        %v178 = vld [vmem:[%s169 + $0x14] sm:$0xf]
        %v179 = vld [vmem:[%s169 + $0x18] sm:$0xf]
        %v180 = vld [vmem:[%s169 + $0x1c] sm:$0xf]
        %v181 = vld [vmem:[%s169 + $0x20] sm:$0xf]
        %v182 = vld [vmem:[%s169 + $0x24] sm:$0xf]
        %v183 = vld [vmem:[%s169 + $0x28] sm:$0xf]
        %v184 = vld [vmem:[%s169 + $0x2c] sm:$0xf]
        %v185 = vld [vmem:[%s169 + $0x30] sm:$0xf]
        %v186 = vld [vmem:[%s169 + $0x34] sm:$0xf]
        %v187 = vld [vmem:[%s169 + $0x38] sm:$0xf]
        %v188 = vld [vmem:[%s169 + $0x3c] sm:$0xf]
        %v189 = vld [vmem:[%s169 + $0x40] sm:$0xf]
        %v190 = vld [vmem:[%s169 + $0x44] sm:$0xf]
        %v191 = vld [vmem:[%s169 + $0x48] sm:$0xf]
        %v192 = vld [vmem:[%s169 + $0x4c] sm:$0xf]
        %v193 = vld [vmem:[%s169 + $0x50] sm:$0xf]
        %v194 = vld [vmem:[%s169 + $0x54] sm:$0xf]
        %v195 = vld [vmem:[%s169 + $0x58] sm:$0xf]
        %v196 = vld [vmem:[%s169 + $0x5c] sm:$0xf]
        %v197 = vld [vmem:[%s169 + $0x60] sm:$0xf]
        %v198 = vld [vmem:[%s169 + $0x64] sm:$0xf]
        %v199 = vld [vmem:[%s169 + $0x68] sm:$0xf]
        %v200 = vld [vmem:[%s169 + $0x6c] sm:$0xf]
        %v201 = vld [vmem:[%s169 + $0x70] sm:$0xf]
        %v202 = vld [vmem:[%s169 + $0x74] sm:$0xf]
        %v203 = vld [vmem:[%s169 + $0x78] sm:$0xf]
        %v204 = vld [vmem:[%s169 + $0x7c] sm:$0xf]
        %v205 = vld [vmem:[%s169 + $0x80] sm:$0xf]
        %v206 = vld [vmem:[%s169 + $0x84] sm:$0xf]
        %v207 = vld [vmem:[%s169 + $0x88] sm:$0xf]
        %v208 = vld [vmem:[%s169 + $0x8c] sm:$0xf]
        %v209 = vld [vmem:[%s169 + $0x90] sm:$0xf]
        %v210 = vld [vmem:[%s169 + $0x94] sm:$0xf]
        %v211 = vld [vmem:[%s169 + $0x98] sm:$0xf]
        %v212 = vld [vmem:[%s169 + $0x9c] sm:$0xf]
        %v213 = vld [vmem:[%s169 + $0xa0] sm:$0xf]
        %v214 = vld [vmem:[%s169 + $0xa4] sm:$0xf]
        %v215 = vld [vmem:[%s169 + $0xa8] sm:$0xf]
        %v216 = vld [vmem:[%s169 + $0xac] sm:$0xf]
        %v217 = vld [vmem:[%s169 + $0xb0] sm:$0xf]
        %v218 = vld [vmem:[%s169 + $0xb4] sm:$0xf]
        %v219 = vld [vmem:[%s169 + $0xb8] sm:$0xf]
        %v220 = vld [vmem:[%s169 + $0xbc] sm:$0xf]
        %v221 = vld [vmem:[%s169 + $0xc0] sm:$0xf]
        %v222 = vld [vmem:[%s169 + $0xc4] sm:$0xf]
        %v223 = vld [vmem:[%s169 + $0xc8] sm:$0xf]
        %v224 = vld [vmem:[%s169 + $0xcc] sm:$0xf]
        %v225 = vld [vmem:[%s169 + $0xd0] sm:$0xf]
        %v226 = vld [vmem:[%s169 + $0xd4] sm:$0xf]
        %v227 = vld [vmem:[%s169 + $0xd8] sm:$0xf]
        %v228 = vld [vmem:[%s169 + $0xdc] sm:$0xf]
        %v229 = vld [vmem:[%s169 + $0xe0] sm:$0xf]
        %v230 = vld [vmem:[%s169 + $0xe4] sm:$0xf]
        %v231 = vld [vmem:[%s169 + $0xe8] sm:$0xf]
        %v232 = vld [vmem:[%s169 + $0xec] sm:$0xf]
        %v233 = vld [vmem:[%s169 + $0xf0] sm:$0xf]
        %v234 = vld [vmem:[%s169 + $0xf4] sm:$0xf]
        %v235 = vld [vmem:[%s169 + $0xf8] sm:$0xf]
        %v236 = vld [vmem:[%s169 + $0xfc] sm:$0xf]
        %v237 = vld [vmem:[%s1] sm:$0xf]
        %v238 = vld [vmem:[%s1 + $0x4] sm:$0xf]
        %v239 = vld [vmem:[%s1 + $0x8] sm:$0xf]
        %v240 = vld [vmem:[%s1 + $0xc] sm:$0x3]
        %v241 = vld [vmem:[%s2] sm:$0x1]
        %v243 = vlaneseq
        %v244 = vshrl.u32 %v243, 7
        %v245 = vsub.s32 0, %v244
        %v246 = vrot.slane %v241, %v245
        %v312 = vunpack.c.l.b16 %v173
        %v313 = vunpack.c.l.b16 %v174
        %v314 = vunpack.c.l.b16 %v175
        %v315 = vunpack.c.l.b16 %v176
        %v316 = vunpack.c.l.b16 %v177
        %v317 = vunpack.c.l.b16 %v178
        %v318 = vunpack.c.l.b16 %v179
        %v319 = vunpack.c.l.b16 %v180
        %v320 = vunpack.c.l.b16 %v181
        %v321 = vunpack.c.l.b16 %v182
        %v322 = vunpack.c.l.b16 %v183
        %v323 = vunpack.c.l.b16 %v184
        %v324 = vunpack.c.l.b16 %v185
        %v325 = vunpack.c.l.b16 %v186
        %v326 = vunpack.c.l.b16 %v187
        %v327 = vunpack.c.l.b16 %v188
        %v328 = vunpack.c.l.b16 %v189
        %v329 = vunpack.c.l.b16 %v190
        %v330 = vunpack.c.l.b16 %v191
        %v331 = vunpack.c.l.b16 %v192
        %v332 = vunpack.c.l.b16 %v193
        %v333 = vunpack.c.l.b16 %v194
        %v334 = vunpack.c.l.b16 %v195
        %v335 = vunpack.c.l.b16 %v196
        %v336 = vunpack.c.l.b16 %v197
        %v337 = vunpack.c.l.b16 %v198
        %v338 = vunpack.c.l.b16 %v199
        %v339 = vunpack.c.l.b16 %v200
        %v340 = vunpack.c.l.b16 %v201
        %v341 = vunpack.c.l.b16 %v202
        %v342 = vunpack.c.l.b16 %v203
        %v343 = vunpack.c.l.b16 %v204
        %v344 = vunpack.c.l.b16 %v205
        %v345 = vunpack.c.l.b16 %v206
        %v346 = vunpack.c.l.b16 %v207
        %v347 = vunpack.c.l.b16 %v208
        %v348 = vunpack.c.l.b16 %v209
        %v349 = vunpack.c.l.b16 %v210
        %v350 = vunpack.c.l.b16 %v211
        %v351 = vunpack.c.l.b16 %v212
        %v352 = vunpack.c.l.b16 %v213
        %v353 = vunpack.c.l.b16 %v214
        %v354 = vunpack.c.l.b16 %v215
        %v355 = vunpack.c.l.b16 %v216
        %v356 = vunpack.c.l.b16 %v217
        %v357 = vunpack.c.l.b16 %v218
        %v358 = vunpack.c.l.b16 %v219
        %v359 = vunpack.c.l.b16 %v220
        %v360 = vunpack.c.l.b16 %v221
        %v361 = vunpack.c.l.b16 %v222
        %v362 = vunpack.c.l.b16 %v223
        %v363 = vunpack.c.l.b16 %v224
        %v364 = vunpack.c.l.b16 %v225
        %v365 = vunpack.c.l.b16 %v226
        %v366 = vunpack.c.l.b16 %v227
        %v367 = vunpack.c.l.b16 %v228
        %v368 = vunpack.c.l.b16 %v229
        %v369 = vunpack.c.l.b16 %v230
        %v370 = vunpack.c.l.b16 %v231
        %v371 = vunpack.c.l.b16 %v232
        %v372 = vunpack.c.l.b16 %v233
        %v373 = vunpack.c.l.b16 %v234
        %v374 = vunpack.c.l.b16 %v235
        %v375 = vunpack.c.l.b16 %v236
        %v376 = vpack.c.b16 %v313, %v312
        %v377 = vpack.c.b16 %v315, %v314
        %v378 = vpack.c.b16 %v317, %v316
        %v379 = vpack.c.b16 %v319, %v318
        %v380 = vpack.c.b16 %v321, %v320
        %v381 = vpack.c.b16 %v323, %v322
        %v382 = vpack.c.b16 %v325, %v324
        %v383 = vpack.c.b16 %v327, %v326
        %v384 = vpack.c.b16 %v329, %v328
        %v385 = vpack.c.b16 %v331, %v330
        %v386 = vpack.c.b16 %v333, %v332
        %v387 = vpack.c.b16 %v335, %v334
        %v388 = vpack.c.b16 %v337, %v336
        %v389 = vpack.c.b16 %v339, %v338
        %v390 = vpack.c.b16 %v341, %v340
        %v391 = vpack.c.b16 %v343, %v342
        %v392 = vpack.c.b16 %v345, %v344
        %v393 = vpack.c.b16 %v347, %v346
        %v394 = vpack.c.b16 %v349, %v348
        %v395 = vpack.c.b16 %v351, %v350
        %v396 = vpack.c.b16 %v353, %v352
        %v397 = vpack.c.b16 %v355, %v354
        %v398 = vpack.c.b16 %v357, %v356
        %v399 = vpack.c.b16 %v359, %v358
        %v400 = vpack.c.b16 %v361, %v360
        %v401 = vpack.c.b16 %v363, %v362
        %v402 = vpack.c.b16 %v365, %v364
        %v403 = vpack.c.b16 %v367, %v366
        %v404 = vpack.c.b16 %v369, %v368
        %v405 = vpack.c.b16 %v371, %v370
        %v406 = vpack.c.b16 %v373, %v372
        %v407 = vpack.c.b16 %v375, %v374
        %v412 = vunpack.c.l.b16 %v237
        %v413 = vunpack.c.l.b16 %v238
        %v414 = vunpack.c.l.b16 %v239
        %v415 = vunpack.c.l.b16 %v240
        %v416 = vpack.c.b16 %v413, %v412
        %v417 = vpack.c.b16 %v415, %v414
        %vm419 = vcmask 220160
        %v421 = vsel %vm419, %v376, 0
        %v424 = vsel %vm419, %v377, 0
        %v427 = vsel %vm419, %v378, 0
        %v430 = vsel %vm419, %v379, 0
        %v433 = vsel %vm419, %v380, 0
        %v436 = vsel %vm419, %v381, 0
        %v439 = vsel %vm419, %v382, 0
        %v442 = vsel %vm419, %v383, 0
        %v445 = vsel %vm419, %v384, 0
        %v448 = vsel %vm419, %v385, 0
        %v451 = vsel %vm419, %v386, 0
        %v454 = vsel %vm419, %v387, 0
        %v457 = vsel %vm419, %v388, 0
        %v460 = vsel %vm419, %v389, 0
        %v463 = vsel %vm419, %v390, 0
        %v466 = vsel %vm419, %v391, 0
        %v469 = vsel %vm419, %v392, 0
        %v472 = vsel %vm419, %v393, 0
        %v475 = vsel %vm419, %v394, 0
        %v478 = vsel %vm419, %v395, 0
        %v481 = vsel %vm419, %v396, 0
        %v484 = vsel %vm419, %v397, 0
        %v487 = vsel %vm419, %v398, 0
        %v490 = vsel %vm419, %v399, 0
        %v493 = vsel %vm419, %v400, 0
        %v496 = vsel %vm419, %v401, 0
        %v499 = vsel %vm419, %v402, 0
        %v502 = vsel %vm419, %v403, 0
        %v505 = vsel %vm419, %v404, 0
        %v508 = vsel %vm419, %v405, 0
        %v511 = vsel %vm419, %v406, 0
        %v514 = vsel %vm419, %v407, 0
        %vm516 = vcmask 1044480
        %vm517 = vcmask 1045504
        %v518 = vsel %vm516, 4294967295, 65535
        %v519 = vsel %vm517, %v518, 0
        %v521 = vand.u32 %v417, %v519
        %523 = vmatprep.subr.bf16.mxu0 0
        %524 = vmatpush1.bf16.msra.mxu0 %v416
        %525 = vmatprep.subr.bf16.mxu0 0
        %526 = vmatpush1.bf16.msra.mxu0 %v521
        %527 = vmatprep.subr.bf16.mxu0 0
        %528 = vmatpush1.bf16.msra.mxu0 0
        %529 = vmatprep.subr.bf16.mxu0 0
        %530 = vmatpush1.bf16.msra.mxu0 0
        %531 = vmatprep.subr.bf16.mxu0 0
        %532 = vmatpush1.bf16.msra.mxu0 0
        %533 = vmatprep.subr.bf16.mxu0 0
        %534 = vmatpush1.bf16.msra.mxu0 0
        %535 = vmatprep.subr.bf16.mxu0 0
        %536 = vmatpush1.bf16.msra.mxu0 0
        %537 = vmatprep.subr.bf16.mxu0 0
        %538 = vmatpush1.bf16.msra.mxu0 0
        %539 = vmatprep.subr.bf16.mxu0 0
        %540 = vmatpush1.bf16.msra.mxu0 0
        %541 = vmatprep.subr.bf16.mxu0 0
        %542 = vmatpush1.bf16.msra.mxu0 0
        %543 = vmatprep.subr.bf16.mxu0 0
        %544 = vmatpush1.bf16.msra.mxu0 0
        %545 = vmatprep.subr.bf16.mxu0 0
        %546 = vmatpush1.bf16.msra.mxu0 0
        %547 = vmatprep.subr.bf16.mxu0 0
        %548 = vmatpush1.bf16.msra.mxu0 0
        %549 = vmatprep.subr.bf16.mxu0 0
        %550 = vmatpush1.bf16.msra.mxu0 0
        %551 = vmatprep.subr.bf16.mxu0 0
        %552 = vmatpush1.bf16.msra.mxu0 0
        %553 = vmatprep.subr.bf16.mxu0 0
        %554 = vmatpush1.bf16.msra.mxu0 0
        %555 = vmatprep.mubr.bf16.mxu0 0
        %556 = vmatmul.mubr.bf16.gmra.mrb[0].mxu0 %v421
        %v557 = vpop.f32.mrb[0].mxu0
        %v558 = vadd.f32 %v246, %v557
        %v559 = vpop.f32.mrb[0].mxu0
        %v560 = vpop.f32.mrb[0].mxu0
        %v561 = vadd.f32 %v246, %v560
        %v562 = vpop.f32.mrb[0].mxu0
        %563 = vmatprep.mubr.bf16.mxu0 0
        %564 = vmatmul.mubr.bf16.gmra.mrb[0].mxu0 %v424
        %v565 = vpop.f32.mrb[0].mxu0
        %v566 = vadd.f32 %v246, %v565
        %v567 = vpop.f32.mrb[0].mxu0
        %v568 = vpop.f32.mrb[0].mxu0
        %v569 = vadd.f32 %v246, %v568
        %v570 = vpop.f32.mrb[0].mxu0
        %571 = vmatprep.mubr.bf16.mxu0 0
        %572 = vmatmul.mubr.bf16.gmra.mrb[0].mxu0 %v427
        %v573 = vpop.f32.mrb[0].mxu0
        %v574 = vadd.f32 %v246, %v573
        %v575 = vpop.f32.mrb[0].mxu0
        %v576 = vpop.f32.mrb[0].mxu0
        %v577 = vadd.f32 %v246, %v576
        %v578 = vpop.f32.mrb[0].mxu0
        %579 = vmatprep.mubr.bf16.mxu0 0
        %580 = vmatmul.mubr.bf16.gmra.mrb[0].mxu0 %v430
        %v581 = vpop.f32.mrb[0].mxu0
        %v582 = vadd.f32 %v246, %v581
        %v583 = vpop.f32.mrb[0].mxu0
        %v584 = vpop.f32.mrb[0].mxu0
        %v585 = vadd.f32 %v246, %v584
        %v586 = vpop.f32.mrb[0].mxu0
        %587 = vmatprep.mubr.bf16.mxu0 0
        %588 = vmatmul.mubr.bf16.gmra.mrb[0].mxu0 %v433
        %v589 = vpop.f32.mrb[0].mxu0
        %v590 = vadd.f32 %v246, %v589
        %v591 = vpop.f32.mrb[0].mxu0
        %v592 = vpop.f32.mrb[0].mxu0
        %v593 = vadd.f32 %v246, %v592
        %v594 = vpop.f32.mrb[0].mxu0
        %595 = vmatprep.mubr.bf16.mxu0 0
        %596 = vmatmul.mubr.bf16.gmra.mrb[0].mxu0 %v436
        %v597 = vpop.f32.mrb[0].mxu0
        %v598 = vadd.f32 %v246, %v597
        %v599 = vpop.f32.mrb[0].mxu0
        %v600 = vpop.f32.mrb[0].mxu0
        %v601 = vadd.f32 %v246, %v600
        %v602 = vpop.f32.mrb[0].mxu0
        %603 = vmatprep.mubr.bf16.mxu0 0
        %604 = vmatmul.mubr.bf16.gmra.mrb[0].mxu0 %v439
        %v605 = vpop.f32.mrb[0].mxu0
        %v606 = vadd.f32 %v246, %v605
        %v607 = vpop.f32.mrb[0].mxu0
        %v608 = vpop.f32.mrb[0].mxu0
        %v609 = vadd.f32 %v246, %v608
        %v610 = vpop.f32.mrb[0].mxu0
        %611 = vmatprep.mubr.bf16.mxu0 0
        %612 = vmatmul.mubr.bf16.gmra.mrb[0].mxu0 %v442
        %v613 = vpop.f32.mrb[0].mxu0
        %v614 = vadd.f32 %v246, %v613
        %v615 = vpop.f32.mrb[0].mxu0
        %v616 = vpop.f32.mrb[0].mxu0
        %v617 = vadd.f32 %v246, %v616
        %v618 = vpop.f32.mrb[0].mxu0
        %619 = vmatprep.mubr.bf16.mxu0 0
        %620 = vmatmul.mubr.bf16.gmra.mrb[0].mxu0 %v445
        %v621 = vpop.f32.mrb[0].mxu0
        %v622 = vadd.f32 %v246, %v621
        %v623 = vpop.f32.mrb[0].mxu0
        %v624 = vpop.f32.mrb[0].mxu0
        %v625 = vadd.f32 %v246, %v624
        %v626 = vpop.f32.mrb[0].mxu0
        %627 = vmatprep.mubr.bf16.mxu0 0
        %628 = vmatmul.mubr.bf16.gmra.mrb[0].mxu0 %v448
        %v629 = vpop.f32.mrb[0].mxu0
        %v630 = vadd.f32 %v246, %v629
        %v631 = vpop.f32.mrb[0].mxu0
        %v632 = vpop.f32.mrb[0].mxu0
        %v633 = vadd.f32 %v246, %v632
        %v634 = vpop.f32.mrb[0].mxu0
        %635 = vmatprep.mubr.bf16.mxu0 0
        %636 = vmatmul.mubr.bf16.gmra.mrb[0].mxu0 %v451
        %v637 = vpop.f32.mrb[0].mxu0
        %v638 = vadd.f32 %v246, %v637
        %v639 = vpop.f32.mrb[0].mxu0
        %v640 = vpop.f32.mrb[0].mxu0
        %v641 = vadd.f32 %v246, %v640
        %v642 = vpop.f32.mrb[0].mxu0
        %643 = vmatprep.mubr.bf16.mxu0 0
        %644 = vmatmul.mubr.bf16.gmra.mrb[0].mxu0 %v454
        %v645 = vpop.f32.mrb[0].mxu0
        %v646 = vadd.f32 %v246, %v645
        %v647 = vpop.f32.mrb[0].mxu0
        %v648 = vpop.f32.mrb[0].mxu0
        %v649 = vadd.f32 %v246, %v648
        %v650 = vpop.f32.mrb[0].mxu0
        %651 = vmatprep.mubr.bf16.mxu0 0
        %652 = vmatmul.mubr.bf16.gmra.mrb[0].mxu0 %v457
        %v653 = vpop.f32.mrb[0].mxu0
        %v654 = vadd.f32 %v246, %v653
        %v655 = vpop.f32.mrb[0].mxu0
        %v656 = vpop.f32.mrb[0].mxu0
        %v657 = vadd.f32 %v246, %v656
        %v658 = vpop.f32.mrb[0].mxu0
        %659 = vmatprep.mubr.bf16.mxu0 0
        %660 = vmatmul.mubr.bf16.gmra.mrb[0].mxu0 %v460
        %v661 = vpop.f32.mrb[0].mxu0
        %v662 = vadd.f32 %v246, %v661
        %v663 = vpop.f32.mrb[0].mxu0
        %v664 = vpop.f32.mrb[0].mxu0
        %v665 = vadd.f32 %v246, %v664
        %v666 = vpop.f32.mrb[0].mxu0
        %667 = vmatprep.mubr.bf16.mxu0 0
        %668 = vmatmul.mubr.bf16.gmra.mrb[0].mxu0 %v463
        %v669 = vpop.f32.mrb[0].mxu0
        %v670 = vadd.f32 %v246, %v669
        %v671 = vpop.f32.mrb[0].mxu0
        %v672 = vpop.f32.mrb[0].mxu0
        %v673 = vadd.f32 %v246, %v672
        %v674 = vpop.f32.mrb[0].mxu0
        %675 = vmatprep.mubr.bf16.mxu0 0
        %676 = vmatmul.mubr.bf16.gmra.mrb[0].mxu0 %v466
        %v677 = vpop.f32.mrb[0].mxu0
        %v678 = vadd.f32 %v246, %v677
        %v679 = vpop.f32.mrb[0].mxu0
        %v680 = vpop.f32.mrb[0].mxu0
        %v681 = vadd.f32 %v246, %v680
        %v682 = vpop.f32.mrb[0].mxu0
        %683 = vmatprep.mubr.bf16.mxu0 0
        %684 = vmatmul.mubr.bf16.gmra.mrb[0].mxu0 %v469
        %v685 = vpop.f32.mrb[0].mxu0
        %v686 = vadd.f32 %v246, %v685
        %v687 = vpop.f32.mrb[0].mxu0
        %v688 = vpop.f32.mrb[0].mxu0
        %v689 = vadd.f32 %v246, %v688
        %v690 = vpop.f32.mrb[0].mxu0
        %691 = vmatprep.mubr.bf16.mxu0 0
        %692 = vmatmul.mubr.bf16.gmra.mrb[0].mxu0 %v472
        %v693 = vpop.f32.mrb[0].mxu0
        %v694 = vadd.f32 %v246, %v693
        %v695 = vpop.f32.mrb[0].mxu0
        %v696 = vpop.f32.mrb[0].mxu0
        %v697 = vadd.f32 %v246, %v696
        %v698 = vpop.f32.mrb[0].mxu0
        %699 = vmatprep.mubr.bf16.mxu0 0
        %700 = vmatmul.mubr.bf16.gmra.mrb[0].mxu0 %v475
        %v701 = vpop.f32.mrb[0].mxu0
        %v702 = vadd.f32 %v246, %v701
        %v703 = vpop.f32.mrb[0].mxu0
        %v704 = vpop.f32.mrb[0].mxu0
        %v705 = vadd.f32 %v246, %v704
        %v706 = vpop.f32.mrb[0].mxu0
        %707 = vmatprep.mubr.bf16.mxu0 0
        %708 = vmatmul.mubr.bf16.gmra.mrb[0].mxu0 %v478
        %v709 = vpop.f32.mrb[0].mxu0
        %v710 = vadd.f32 %v246, %v709
        %v711 = vpop.f32.mrb[0].mxu0
        %v712 = vpop.f32.mrb[0].mxu0
        %v713 = vadd.f32 %v246, %v712
        %v714 = vpop.f32.mrb[0].mxu0
        %715 = vmatprep.mubr.bf16.mxu0 0
        %716 = vmatmul.mubr.bf16.gmra.mrb[0].mxu0 %v481
        %v717 = vpop.f32.mrb[0].mxu0
        %v718 = vadd.f32 %v246, %v717
        %v719 = vpop.f32.mrb[0].mxu0
        %v720 = vpop.f32.mrb[0].mxu0
        %v721 = vadd.f32 %v246, %v720
        %v722 = vpop.f32.mrb[0].mxu0
        %723 = vmatprep.mubr.bf16.mxu0 0
        %724 = vmatmul.mubr.bf16.gmra.mrb[0].mxu0 %v484
        %v725 = vpop.f32.mrb[0].mxu0
        %v726 = vadd.f32 %v246, %v725
        %v727 = vpop.f32.mrb[0].mxu0
        %v728 = vpop.f32.mrb[0].mxu0
        %v729 = vadd.f32 %v246, %v728
        %v730 = vpop.f32.mrb[0].mxu0
        %731 = vmatprep.mubr.bf16.mxu0 0
        %732 = vmatmul.mubr.bf16.gmra.mrb[0].mxu0 %v487
        %v733 = vpop.f32.mrb[0].mxu0
        %v734 = vadd.f32 %v246, %v733
        %v735 = vpop.f32.mrb[0].mxu0
        %v736 = vpop.f32.mrb[0].mxu0
        %v737 = vadd.f32 %v246, %v736
        %v738 = vpop.f32.mrb[0].mxu0
        %739 = vmatprep.mubr.bf16.mxu0 0
        %740 = vmatmul.mubr.bf16.gmra.mrb[0].mxu0 %v490
        %v741 = vpop.f32.mrb[0].mxu0
        %v742 = vadd.f32 %v246, %v741
        %v743 = vpop.f32.mrb[0].mxu0
        %v744 = vpop.f32.mrb[0].mxu0
        %v745 = vadd.f32 %v246, %v744
        %v746 = vpop.f32.mrb[0].mxu0
        %747 = vmatprep.mubr.bf16.mxu0 0
        %748 = vmatmul.mubr.bf16.gmra.mrb[0].mxu0 %v493
        %v749 = vpop.f32.mrb[0].mxu0
        %v750 = vadd.f32 %v246, %v749
        %v751 = vpop.f32.mrb[0].mxu0
        %v752 = vpop.f32.mrb[0].mxu0
        %v753 = vadd.f32 %v246, %v752
        %v754 = vpop.f32.mrb[0].mxu0
        %755 = vmatprep.mubr.bf16.mxu0 0
        %756 = vmatmul.mubr.bf16.gmra.mrb[0].mxu0 %v496
        %v757 = vpop.f32.mrb[0].mxu0
        %v758 = vadd.f32 %v246, %v757
        %v759 = vpop.f32.mrb[0].mxu0
        %v760 = vpop.f32.mrb[0].mxu0
        %v761 = vadd.f32 %v246, %v760
        %v762 = vpop.f32.mrb[0].mxu0
        %763 = vmatprep.mubr.bf16.mxu0 0
        %764 = vmatmul.mubr.bf16.gmra.mrb[0].mxu0 %v499
        %v765 = vpop.f32.mrb[0].mxu0
        %v766 = vadd.f32 %v246, %v765
        %v767 = vpop.f32.mrb[0].mxu0
        %v768 = vpop.f32.mrb[0].mxu0
        %v769 = vadd.f32 %v246, %v768
        %v770 = vpop.f32.mrb[0].mxu0
        %771 = vmatprep.mubr.bf16.mxu0 0
        %772 = vmatmul.mubr.bf16.gmra.mrb[0].mxu0 %v502
        %v773 = vpop.f32.mrb[0].mxu0
        %v774 = vadd.f32 %v246, %v773
        %v775 = vpop.f32.mrb[0].mxu0
        %v776 = vpop.f32.mrb[0].mxu0
        %v777 = vadd.f32 %v246, %v776
        %v778 = vpop.f32.mrb[0].mxu0
        %779 = vmatprep.mubr.bf16.mxu0 0
        %780 = vmatmul.mubr.bf16.gmra.mrb[0].mxu0 %v505
        %v781 = vpop.f32.mrb[0].mxu0
        %v782 = vadd.f32 %v246, %v781
        %v783 = vpop.f32.mrb[0].mxu0
        %v784 = vpop.f32.mrb[0].mxu0
        %v785 = vadd.f32 %v246, %v784
        %v786 = vpop.f32.mrb[0].mxu0
        %787 = vmatprep.mubr.bf16.mxu0 0
        %788 = vmatmul.mubr.bf16.gmra.mrb[0].mxu0 %v508
        %v789 = vpop.f32.mrb[0].mxu0
        %v790 = vadd.f32 %v246, %v789
        %v791 = vpop.f32.mrb[0].mxu0
        %v792 = vpop.f32.mrb[0].mxu0
        %v793 = vadd.f32 %v246, %v792
        %v794 = vpop.f32.mrb[0].mxu0
        %795 = vmatprep.mubr.bf16.mxu0 0
        %796 = vmatmul.mubr.bf16.gmra.mrb[0].mxu0 %v511
        %v797 = vpop.f32.mrb[0].mxu0
        %v798 = vadd.f32 %v246, %v797
        %v799 = vpop.f32.mrb[0].mxu0
        %v800 = vpop.f32.mrb[0].mxu0
        %v801 = vadd.f32 %v246, %v800
        %v802 = vpop.f32.mrb[0].mxu0
        %803 = vmatprep.mubr.bf16.mxu0 0
        %804 = vmatmul.mubr.bf16.gmra.mrb[0].mxu0 %v514
        %v805 = vpop.f32.mrb[0].mxu0
        %v806 = vadd.f32 %v246, %v805
        %v807 = vpop.f32.mrb[0].mxu0
        %v808 = vpop.f32.mrb[0].mxu0
        %v809 = vadd.f32 %v246, %v808
        %v810 = vpop.f32.mrb[0].mxu0
        %811 = vdwg.mxu0
        %vm812 = vcmp.gt.f32.partialorder %v558, 0.0
        %vm813 = vcmp.gt.f32.partialorder %v561, 0.0
        %vm814 = vcmp.gt.f32.partialorder %v566, 0.0
        %vm815 = vcmp.gt.f32.partialorder %v569, 0.0
        %vm816 = vcmp.gt.f32.partialorder %v574, 0.0
        %vm817 = vcmp.gt.f32.partialorder %v577, 0.0
        %vm818 = vcmp.gt.f32.partialorder %v582, 0.0
        %vm819 = vcmp.gt.f32.partialorder %v585, 0.0
        %vm820 = vcmp.gt.f32.partialorder %v590, 0.0
        %vm821 = vcmp.gt.f32.partialorder %v593, 0.0
        %vm822 = vcmp.gt.f32.partialorder %v598, 0.0
        %vm823 = vcmp.gt.f32.partialorder %v601, 0.0
        %vm824 = vcmp.gt.f32.partialorder %v606, 0.0
        %vm825 = vcmp.gt.f32.partialorder %v609, 0.0
        %vm826 = vcmp.gt.f32.partialorder %v614, 0.0
        %vm827 = vcmp.gt.f32.partialorder %v617, 0.0
        %vm828 = vcmp.gt.f32.partialorder %v622, 0.0
        %vm829 = vcmp.gt.f32.partialorder %v625, 0.0
        %vm830 = vcmp.gt.f32.partialorder %v630, 0.0
        %vm831 = vcmp.gt.f32.partialorder %v633, 0.0
        %vm832 = vcmp.gt.f32.partialorder %v638, 0.0
        %vm833 = vcmp.gt.f32.partialorder %v641, 0.0
        %vm834 = vcmp.gt.f32.partialorder %v646, 0.0
        %vm835 = vcmp.gt.f32.partialorder %v649, 0.0
        %vm836 = vcmp.gt.f32.partialorder %v654, 0.0
        %vm837 = vcmp.gt.f32.partialorder %v657, 0.0
        %vm838 = vcmp.gt.f32.partialorder %v662, 0.0
        %vm839 = vcmp.gt.f32.partialorder %v665, 0.0
        %vm840 = vcmp.gt.f32.partialorder %v670, 0.0
        %vm841 = vcmp.gt.f32.partialorder %v673, 0.0
        %vm842 = vcmp.gt.f32.partialorder %v678, 0.0
        %vm843 = vcmp.gt.f32.partialorder %v681, 0.0
        %vm844 = vcmp.gt.f32.partialorder %v686, 0.0
        %vm845 = vcmp.gt.f32.partialorder %v689, 0.0
        %vm846 = vcmp.gt.f32.partialorder %v694, 0.0
        %vm847 = vcmp.gt.f32.partialorder %v697, 0.0
        %vm848 = vcmp.gt.f32.partialorder %v702, 0.0
        %vm849 = vcmp.gt.f32.partialorder %v705, 0.0
        %vm850 = vcmp.gt.f32.partialorder %v710, 0.0
        %vm851 = vcmp.gt.f32.partialorder %v713, 0.0
        %vm852 = vcmp.gt.f32.partialorder %v718, 0.0
        %vm853 = vcmp.gt.f32.partialorder %v721, 0.0
        %vm854 = vcmp.gt.f32.partialorder %v726, 0.0
        %vm855 = vcmp.gt.f32.partialorder %v729, 0.0
        %vm856 = vcmp.gt.f32.partialorder %v734, 0.0
        %vm857 = vcmp.gt.f32.partialorder %v737, 0.0
        %vm858 = vcmp.gt.f32.partialorder %v742, 0.0
        %vm859 = vcmp.gt.f32.partialorder %v745, 0.0
        %vm860 = vcmp.gt.f32.partialorder %v750, 0.0
        %vm861 = vcmp.gt.f32.partialorder %v753, 0.0
        %vm862 = vcmp.gt.f32.partialorder %v758, 0.0
        %vm863 = vcmp.gt.f32.partialorder %v761, 0.0
        %vm864 = vcmp.gt.f32.partialorder %v766, 0.0
        %vm865 = vcmp.gt.f32.partialorder %v769, 0.0
        %vm866 = vcmp.gt.f32.partialorder %v774, 0.0
        %vm867 = vcmp.gt.f32.partialorder %v777, 0.0
        %vm868 = vcmp.gt.f32.partialorder %v782, 0.0
        %vm869 = vcmp.gt.f32.partialorder %v785, 0.0
        %vm870 = vcmp.gt.f32.partialorder %v790, 0.0
        %vm871 = vcmp.gt.f32.partialorder %v793, 0.0
        %vm872 = vcmp.gt.f32.partialorder %v798, 0.0
        %vm873 = vcmp.gt.f32.partialorder %v801, 0.0
        %vm874 = vcmp.gt.f32.partialorder %v806, 0.0
        %vm875 = vcmp.gt.f32.partialorder %v809, 0.0
        %v876 = vmul.f32 %v558, 0.1
        %v877 = vmul.f32 %v561, 0.1
        %v878 = vmul.f32 %v566, 0.1
        %v879 = vmul.f32 %v569, 0.1
        %v880 = vmul.f32 %v574, 0.1
        %v881 = vmul.f32 %v577, 0.1
        %v882 = vmul.f32 %v582, 0.1
        %v883 = vmul.f32 %v585, 0.1
        %v884 = vmul.f32 %v590, 0.1
        %v885 = vmul.f32 %v593, 0.1
        %v886 = vmul.f32 %v598, 0.1
        %v887 = vmul.f32 %v601, 0.1
        %v888 = vmul.f32 %v606, 0.1
        %v889 = vmul.f32 %v609, 0.1
        %v890 = vmul.f32 %v614, 0.1
        %v891 = vmul.f32 %v617, 0.1
        %v892 = vmul.f32 %v622, 0.1
        %v893 = vmul.f32 %v625, 0.1
        %v894 = vmul.f32 %v630, 0.1
        %v895 = vmul.f32 %v633, 0.1
        %v896 = vmul.f32 %v638, 0.1
        %v897 = vmul.f32 %v641, 0.1
        %v898 = vmul.f32 %v646, 0.1
        %v899 = vmul.f32 %v649, 0.1
        %v900 = vmul.f32 %v654, 0.1
        %v901 = vmul.f32 %v657, 0.1
        %v902 = vmul.f32 %v662, 0.1
        %v903 = vmul.f32 %v665, 0.1
        %v904 = vmul.f32 %v670, 0.1
        %v905 = vmul.f32 %v673, 0.1
        %v906 = vmul.f32 %v678, 0.1
        %v907 = vmul.f32 %v681, 0.1
        %v908 = vmul.f32 %v686, 0.1
        %v909 = vmul.f32 %v689, 0.1
        %v910 = vmul.f32 %v694, 0.1
        %v911 = vmul.f32 %v697, 0.1
        %v912 = vmul.f32 %v702, 0.1
        %v913 = vmul.f32 %v705, 0.1
        %v914 = vmul.f32 %v710, 0.1
        %v915 = vmul.f32 %v713, 0.1
        %v916 = vmul.f32 %v718, 0.1
        %v917 = vmul.f32 %v721, 0.1
        %v918 = vmul.f32 %v726, 0.1
        %v919 = vmul.f32 %v729, 0.1
        %v920 = vmul.f32 %v734, 0.1
        %v921 = vmul.f32 %v737, 0.1
        %v922 = vmul.f32 %v742, 0.1
        %v923 = vmul.f32 %v745, 0.1
        %v924 = vmul.f32 %v750, 0.1
        %v925 = vmul.f32 %v753, 0.1
        %v926 = vmul.f32 %v758, 0.1
        %v927 = vmul.f32 %v761, 0.1
        %v928 = vmul.f32 %v766, 0.1
        %v929 = vmul.f32 %v769, 0.1
        %v930 = vmul.f32 %v774, 0.1
        %v931 = vmul.f32 %v777, 0.1
        %v932 = vmul.f32 %v782, 0.1
        %v933 = vmul.f32 %v785, 0.1
        %v934 = vmul.f32 %v790, 0.1
        %v935 = vmul.f32 %v793, 0.1
        %v936 = vmul.f32 %v798, 0.1
        %v937 = vmul.f32 %v801, 0.1
        %v938 = vmul.f32 %v806, 0.1
        %v939 = vmul.f32 %v809, 0.1
        %v940 = vsel %vm812, %v558, %v876
        %v941 = vsel %vm813, %v561, %v877
        %v942 = vsel %vm814, %v566, %v878
        %v943 = vsel %vm815, %v569, %v879
        %v944 = vsel %vm816, %v574, %v880
        %v945 = vsel %vm817, %v577, %v881
        %v946 = vsel %vm818, %v582, %v882
        %v947 = vsel %vm819, %v585, %v883
        %v948 = vsel %vm820, %v590, %v884
        %v949 = vsel %vm821, %v593, %v885
        %v950 = vsel %vm822, %v598, %v886
        %v951 = vsel %vm823, %v601, %v887
        %v952 = vsel %vm824, %v606, %v888
        %v953 = vsel %vm825, %v609, %v889
        %v954 = vsel %vm826, %v614, %v890
        %v955 = vsel %vm827, %v617, %v891
        %v956 = vsel %vm828, %v622, %v892
        %v957 = vsel %vm829, %v625, %v893
        %v958 = vsel %vm830, %v630, %v894
        %v959 = vsel %vm831, %v633, %v895
        %v960 = vsel %vm832, %v638, %v896
        %v961 = vsel %vm833, %v641, %v897
        %v962 = vsel %vm834, %v646, %v898
        %v963 = vsel %vm835, %v649, %v899
        %v964 = vsel %vm836, %v654, %v900
        %v965 = vsel %vm837, %v657, %v901
        %v966 = vsel %vm838, %v662, %v902
        %v967 = vsel %vm839, %v665, %v903
        %v968 = vsel %vm840, %v670, %v904
        %v969 = vsel %vm841, %v673, %v905
        %v970 = vsel %vm842, %v678, %v906
        %v971 = vsel %vm843, %v681, %v907
        %v972 = vsel %vm844, %v686, %v908
        %v973 = vsel %vm845, %v689, %v909
        %v974 = vsel %vm846, %v694, %v910
        %v975 = vsel %vm847, %v697, %v911
        %v976 = vsel %vm848, %v702, %v912
        %v977 = vsel %vm849, %v705, %v913
        %v978 = vsel %vm850, %v710, %v914
        %v979 = vsel %vm851, %v713, %v915
        %v980 = vsel %vm852, %v718, %v916
        %v981 = vsel %vm853, %v721, %v917
        %v982 = vsel %vm854, %v726, %v918
        %v983 = vsel %vm855, %v729, %v919
        %v984 = vsel %vm856, %v734, %v920
        %v985 = vsel %vm857, %v737, %v921
        %v986 = vsel %vm858, %v742, %v922
        %v987 = vsel %vm859, %v745, %v923
        %v988 = vsel %vm860, %v750, %v924
        %v989 = vsel %vm861, %v753, %v925
        %v990 = vsel %vm862, %v758, %v926
        %v991 = vsel %vm863, %v761, %v927
        %v992 = vsel %vm864, %v766, %v928
        %v993 = vsel %vm865, %v769, %v929
        %v994 = vsel %vm866, %v774, %v930
        %v995 = vsel %vm867, %v777, %v931
        %v996 = vsel %vm868, %v782, %v932
        %v997 = vsel %vm869, %v785, %v933
        %v998 = vsel %vm870, %v790, %v934
        %v999 = vsel %vm871, %v793, %v935
        %v1000 = vsel %vm872, %v798, %v936
        %v1001 = vsel %vm873, %v801, %v937
        %v1002 = vsel %vm874, %v806, %v938
        %v1003 = vsel %vm875, %v809, %v939
        %1004 = vst [vmem:[%s164] sm:$0xff] %v940
        %1005 = vst [vmem:[%s164 + $0x8] sm:$0xff] %v941
        %1006 = vst [vmem:[%s164 + $0x10] sm:$0xff] %v942
        %1007 = vst [vmem:[%s164 + $0x18] sm:$0xff] %v943
        %1008 = vst [vmem:[%s164 + $0x20] sm:$0xff] %v944
        %1009 = vst [vmem:[%s164 + $0x28] sm:$0xff] %v945
        %1010 = vst [vmem:[%s164 + $0x30] sm:$0xff] %v946
        %1011 = vst [vmem:[%s164 + $0x38] sm:$0xff] %v947
        %1012 = vst [vmem:[%s164 + $0x40] sm:$0xff] %v948
        %1013 = vst [vmem:[%s164 + $0x48] sm:$0xff] %v949
        %1014 = vst [vmem:[%s164 + $0x50] sm:$0xff] %v950
        %1015 = vst [vmem:[%s164 + $0x58] sm:$0xff] %v951
        %1016 = vst [vmem:[%s164 + $0x60] sm:$0xff] %v952
        %1017 = vst [vmem:[%s164 + $0x68] sm:$0xff] %v953
        %1018 = vst [vmem:[%s164 + $0x70] sm:$0xff] %v954
        %1019 = vst [vmem:[%s164 + $0x78] sm:$0xff] %v955
        %1020 = vst [vmem:[%s164 + $0x80] sm:$0xff] %v956
        %1021 = vst [vmem:[%s164 + $0x88] sm:$0xff] %v957
        %1022 = vst [vmem:[%s164 + $0x90] sm:$0xff] %v958
        %1023 = vst [vmem:[%s164 + $0x98] sm:$0xff] %v959
        %1024 = vst [vmem:[%s164 + $0xa0] sm:$0xff] %v960
        %1025 = vst [vmem:[%s164 + $0xa8] sm:$0xff] %v961
        %1026 = vst [vmem:[%s164 + $0xb0] sm:$0xff] %v962
        %1027 = vst [vmem:[%s164 + $0xb8] sm:$0xff] %v963
        %1028 = vst [vmem:[%s164 + $0xc0] sm:$0xff] %v964
        %1029 = vst [vmem:[%s164 + $0xc8] sm:$0xff] %v965
        %1030 = vst [vmem:[%s164 + $0xd0] sm:$0xff] %v966
        %1031 = vst [vmem:[%s164 + $0xd8] sm:$0xff] %v967
        %1032 = vst [vmem:[%s164 + $0xe0] sm:$0xff] %v968
        %1033 = vst [vmem:[%s164 + $0xe8] sm:$0xff] %v969
        %1034 = vst [vmem:[%s164 + $0xf0] sm:$0xff] %v970
        %1035 = vst [vmem:[%s164 + $0xf8] sm:$0xff] %v971
        %1036 = vst [vmem:[%s164 + $0x100] sm:$0xff] %v972
        %1037 = vst [vmem:[%s164 + $0x108] sm:$0xff] %v973
        %1038 = vst [vmem:[%s164 + $0x110] sm:$0xff] %v974
        %1039 = vst [vmem:[%s164 + $0x118] sm:$0xff] %v975
        %1040 = vst [vmem:[%s164 + $0x120] sm:$0xff] %v976
        %1041 = vst [vmem:[%s164 + $0x128] sm:$0xff] %v977
        %1042 = vst [vmem:[%s164 + $0x130] sm:$0xff] %v978
        %1043 = vst [vmem:[%s164 + $0x138] sm:$0xff] %v979
        %1044 = vst [vmem:[%s164 + $0x140] sm:$0xff] %v980
        %1045 = vst [vmem:[%s164 + $0x148] sm:$0xff] %v981
        %1046 = vst [vmem:[%s164 + $0x150] sm:$0xff] %v982
        %1047 = vst [vmem:[%s164 + $0x158] sm:$0xff] %v983
        %1048 = vst [vmem:[%s164 + $0x160] sm:$0xff] %v984
        %1049 = vst [vmem:[%s164 + $0x168] sm:$0xff] %v985
        %1050 = vst [vmem:[%s164 + $0x170] sm:$0xff] %v986
        %1051 = vst [vmem:[%s164 + $0x178] sm:$0xff] %v987
        %1052 = vst [vmem:[%s164 + $0x180] sm:$0xff] %v988
        %1053 = vst [vmem:[%s164 + $0x188] sm:$0xff] %v989
        %1054 = vst [vmem:[%s164 + $0x190] sm:$0xff] %v990
        %1055 = vst [vmem:[%s164 + $0x198] sm:$0xff] %v991
        %1056 = vst [vmem:[%s164 + $0x1a0] sm:$0xff] %v992
        %1057 = vst [vmem:[%s164 + $0x1a8] sm:$0xff] %v993
        %1058 = vst [vmem:[%s164 + $0x1b0] sm:$0xff] %v994
        %1059 = vst [vmem:[%s164 + $0x1b8] sm:$0xff] %v995
        %1060 = vst [vmem:[%s164 + $0x1c0] sm:$0xff] %v996
        %1061 = vst [vmem:[%s164 + $0x1c8] sm:$0xff] %v997
        %1062 = vst [vmem:[%s164 + $0x1d0] sm:$0xff] %v998
        %1063 = vst [vmem:[%s164 + $0x1d8] sm:$0xff] %v999
        %1064 = vst [vmem:[%s164 + $0x1e0] sm:$0xff] %v1000
        %1065 = vst [vmem:[%s164 + $0x1e8] sm:$0xff] %v1001
        %1066 = vst [vmem:[%s164 + $0x1f0] sm:$0xff] %v1002
        %1067 = vst [vmem:[%s164 + $0x1f8] sm:$0xff] %v1003
        %s1068 = sand.u32 %s93, 1
        %s1069 = scalar_lea.sflag [#allocation3], %s1068
        %s1070 = sand.u32 %s93, 1
        %s1071 = smul.addr %s1070, 512
        %s1072 = scalar_lea.vmem [#allocation2], %s1071
        // Predicated region
        $region33: #{tpu_custom_call.1} parent=31 // pred_check
          %p1073 = pneg %p103
        $region34: #{tpu_custom_call.1} parent=31 // pred_check_branch
          %1075 = sbr.rel (%p1073) target = $region36
        $region35: #{tpu_custom_call.1} parent=31 // pred_region
          %s1076 = smul.u32 64, %s17
          %s1078 = ssub.s32 8192, 8192
          %1079 = vsyncadd %s1069, %s1078
          %s1080 = smul.addr %s1076, 128
          %s1081 = scalar_lea.hbm %s3, %s1080
          %s1082 = sshll.u32 %s1072, 4
          %s1083 = int_to_ptr.vmem [resolvable:$true] %s1082
          %1088 = dma.vmem_to_hbm [thread:$0]  %s1083, 8192, %s1081, %s1069, 128, 128, 8
        $region36: #{tpu_custom_call.1} parent=31 // pred_fallthru
          _
      $region32: #{tpu_custom_call.1} parent=5 // pred_fallthru
        _
      %p1089 = scmp.le.s32.totalorder 2, %s12
      // Predicated region
      $region37: #{tpu_custom_call.1} parent=5 // pred_check
        %p1090 = pneg %p1089
      $region38: #{tpu_custom_call.1} parent=5 // pred_check_branch
        %1092 = sbr.rel (%p1090) target = $region40
      $region39: #{tpu_custom_call.1} parent=5 // pred_region
        %s1093 = ssub.s32 %s12, 2
        // Predicated region
        $region41: #{tpu_custom_call.1} parent=39 // pred_check
          %p1094 = pneg %p109
        $region42: #{tpu_custom_call.1} parent=39 // pred_check_branch
          %1096 = sbr.rel (%p1094) target = $region44
        $region43: #{tpu_custom_call.1} parent=39 // pred_region
          %s1097 = sand.u32 %s94, 1
          %s1098 = scalar_lea.sflag [#allocation3], %s1097
          %s1099 = sand.u32 %s94, 1
          %s1100 = smul.addr %s1099, 512
          %s1101 = scalar_lea.vmem [#allocation2], %s1100
          %1102 = dma.done %s1098, 8192
        $region44: #{tpu_custom_call.1} parent=39 // pred_fallthru
          _
      $region40: #{tpu_custom_call.1} parent=5 // pred_fallthru
        _
    $region6: #{tpu_custom_call.1} parent=1 // loop_footer
      %s16 = sadd.s32 1, %s12
    $region7: #{tpu_custom_call.1} parent=1 // loop_footer_branch
      %11 = sbr.rel target = $region3
    $region8: #{tpu_custom_call.1} parent=1 // loop_exit
      _
    %1103 = vsyncpa [#allocation3], 1
    %s1104 = scalar_lea.sflag [#allocation3], 1
    %1105 = vsyncpa %s1104, 1

</llo_original>
